<compile_context>
chip_gen: v6e
topology: v6e:2x2x1
jax: 0.10.0
libtpu: 0.0.40
codegen_flags: <defaults>
</compile_context>

<pallas_src>
import math
import functools

import jax
import jax.numpy as jnp
from jax import lax
from jax.experimental import pallas as pl
from jax.experimental.pallas import tpu as pltpu


# ----------------------------------------------------------------------------
# Kernel 1: GroupNorm statistics -> precombined per-channel (scale, shift)
# ----------------------------------------------------------------------------
def _gn_stats_kernel(x_ref, gamma_ref, beta_ref, mg_ref, mgt_ref,
                     scale_ref, shift_ref, sum_sc, sumsq_sc, *, inv_n, eps):
    s_idx = pl.program_id(1)

    @pl.when(s_idx == 0)
    def _init():
        sum_sc[...] = jnp.zeros_like(sum_sc)
        sumsq_sc[...] = jnp.zeros_like(sumsq_sc)

    x = x_ref[...]                                             # (ts, Cp) f32
    sum_sc[...] += jnp.sum(x, axis=0, keepdims=True)           # (1, Cp)
    sumsq_sc[...] += jnp.sum(x * x, axis=0, keepdims=True)     # (1, Cp)

    @pl.when(s_idx == pl.num_programs(1) - 1)
    def _finalize():
        # Aggregate per-channel sums into per-group sums with a one-hot matmul
        # (padded channels have an all-zero membership row -> excluded).
        g_sum = jnp.dot(sum_sc[...], mg_ref[...],
                        preferred_element_type=jnp.float32)    # (1, G)
        g_sumsq = jnp.dot(sumsq_sc[...], mg_ref[...],
                          preferred_element_type=jnp.float32)  # (1, G)
        mean_g = g_sum * inv_n
        # NOTE: E[x^2] - E[x]^2 in f32 (matches common GroupNorm kernels); can
        # lose precision if activations have a large mean relative to spread.
        var_g = g_sumsq * inv_n - mean_g * mean_g
        inv_g = lax.rsqrt(var_g + eps)
        mean_c = jnp.dot(mean_g, mgt_ref[...],
                         preferred_element_type=jnp.float32)   # (1, Cp)
        inv_c = jnp.dot(inv_g, mgt_ref[...],
                        preferred_element_type=jnp.float32)    # (1, Cp)
        scale = inv_c * gamma_ref[...]
        scale_ref[...] = scale
        shift_ref[...] = beta_ref[...] - mean_c * scale


# ----------------------------------------------------------------------------
# Kernel 2: fused (normalize -> qkv proj -> flash attention -> out proj -> +skip)
# ----------------------------------------------------------------------------
def _attn_kernel(xq_ref, xkv_ref, scale_ref, shift_ref,
                 wq_ref, bq_ref, wkv_ref, bkv_ref, wo_ref, bo_ref,
                 o_ref, q_sc, m_sc, l_sc, acc_sc, *, cmp):
    j = pl.program_id(2)

    @pl.when(j == 0)
    def _init():
        # Normalize the query tile and project it once per q-tile; 1/sqrt(Cm)
        # is already folded into wq/bq by the wrapper.
        hq = xq_ref[...] * scale_ref[...] + shift_ref[...]                 # (tq, Cp)
        q = jnp.dot(hq.astype(jnp.bfloat16), wq_ref[...],
                    preferred_element_type=jnp.float32) + bq_ref[...]
        q_sc[...] = q.astype(jnp.bfloat16)
        m_sc[...] = jnp.full_like(m_sc, -jnp.inf)
        l_sc[...] = jnp.zeros_like(l_sc)
        acc_sc[...] = jnp.zeros_like(acc_sc)

    # Normalize the kv tile and project k,v in one packed bf16 matmul.
    hkv = xkv_ref[...] * scale_ref[...] + shift_ref[...]                   # (tk, Cp)
    kv = jnp.dot(hkv.astype(jnp.bfloat16), wkv_ref[...],
                 preferred_element_type=jnp.float32) + bkv_ref[...]        # (tk, 2*Cmp)
    k = kv[:, :cmp].astype(jnp.bfloat16)
    v = kv[:, cmp:].astype(jnp.bfloat16)

    # scores = q . k^T  (contraction on the channel axis, bf16 -> f32 acc)
    s = lax.dot_general(q_sc[...], k, (((1,), (1,)), ((), ())),
                        preferred_element_type=jnp.float32)                # (tq, tk)

    # Online (flash) softmax update.
    m_prev = m_sc[...]
    m_new = jnp.maximum(m_prev, jnp.max(s, axis=-1, keepdims=True))
    alpha = jnp.exp(m_prev - m_new)
    p = jnp.exp(s - m_new)                                                 # unnormalized
    l_sc[...] = alpha * l_sc[...] + jnp.sum(p, axis=-1, keepdims=True)
    acc_sc[...] = alpha * acc_sc[...] + jnp.dot(
        p.astype(jnp.bfloat16), v, preferred_element_type=jnp.float32)
    m_sc[...] = m_new

    @pl.when(j == pl.num_programs(2) - 1)
    def _finalize():
        attn = acc_sc[...] * pl.reciprocal(l_sc[...], approx=True)         # (tq, Cmp)
        y = jnp.dot(attn.astype(jnp.bfloat16), wo_ref[...],
                    preferred_element_type=jnp.float32) + bo_ref[...]
        o_ref[...] = (y + xq_ref[...]).astype(o_ref.dtype)                 # Identity skip


# ----------------------------------------------------------------------------
# Wrapper
# ----------------------------------------------------------------------------
def _pad_to(n, m=128):
    return ((n + m - 1) // m) * m


def _seq_tile(s, cap=128):
    if s <= cap:
        return s
    for t in range(cap, 7, -1):
        if s % t == 0 and t % 8 == 0:
            return t
    return s


def attention_block(x_nchw, params, *, num_groups=32, eps=1e-6):
    """x_nchw: (B, C, H, W) float32 (PyTorch convention)."""
    B, C, H, W = x_nchw.shape
    S = H * W
    Cm = params["wq"].shape[1]
    Co = params["wo"].shape[1]
    assert C % num_groups == 0
    assert C == Co, "skip path implemented as Identity (in_channels == out_channels)"
    # TODO(synk): in_channels != out_channels skip-Conv2d path not implemented.
    group_size = C // num_groups

    Cp, Cmp, Cop = _pad_to(C), _pad_to(Cm), _pad_to(Co)

    # tokens-major, channel-padded layout
    x = jnp.transpose(x_nchw, (0, 2, 3, 1)).reshape(B, S, C).astype(jnp.float32)
    x = jnp.pad(x, ((0, 0), (0, 0), (0, Cp - C)))

    gamma = jnp.pad(params["gamma"].astype(jnp.float32), (0, Cp - C)).reshape(1, Cp)
    beta = jnp.pad(params["beta"].astype(jnp.float32), (0, Cp - C)).reshape(1, Cp)

    # one-hot group membership (padded channels belong to no group)
    ch_ids = jnp.arange(C) // group_size
    mg = jax.nn.one_hot(ch_ids, num_groups, dtype=jnp.float32)       # (C, G)
    mg = jnp.pad(mg, ((0, Cp - C), (0, 0)))                          # (Cp, G)
    mgt = mg.T                                                       # (G, Cp)

    # fold 1/sqrt(Cm) into the q projection, pack k/v, pad, cast weights to bf16
    qscale = 1.0 / math.sqrt(Cm)
    wq = jnp.pad(params["wq"] * qscale, ((0, Cp - C), (0, Cmp - Cm)))
    bq = jnp.pad(params["bq"] * qscale, (0, Cmp - Cm)).reshape(1, Cmp)
    wk = jnp.pad(params["wk"], ((0, Cp - C), (0, Cmp - Cm)))
    wv = jnp.pad(params["wv"], ((0, Cp - C), (0, Cmp - Cm)))
    wkv = jnp.concatenate([wk, wv], axis=1)                          # (Cp, 2*Cmp)
    bk = jnp.pad(params["bk"], (0, Cmp - Cm))
    bv = jnp.pad(params["bv"], (0, Cmp - Cm))
    bkv = jnp.concatenate([bk, bv], axis=0).reshape(1, 2 * Cmp)
    wo = jnp.pad(params["wo"], ((0, Cmp - Cm), (0, Cop - Co)))
    bo = jnp.pad(params["bo"], (0, Cop - Co)).reshape(1, Cop)

    wq_bf = wq.astype(jnp.bfloat16)
    wkv_bf = wkv.astype(jnp.bfloat16)
    wo_bf = wo.astype(jnp.bfloat16)
    bq = bq.astype(jnp.float32)
    bkv = bkv.astype(jnp.float32)
    bo = bo.astype(jnp.float32)

    # ---------------- Kernel 1: GroupNorm -> per-channel (scale, shift) --------
    ts = _seq_tile(S)
    ns = S // ts
    stats_kernel = functools.partial(
        _gn_stats_kernel, inv_n=1.0 / float(S * group_size), eps=eps)
    scale, shift = pl.pallas_call(
        stats_kernel,
        out_shape=(jax.ShapeDtypeStruct((B, 1, Cp), jnp.float32),
                   jax.ShapeDtypeStruct((B, 1, Cp), jnp.float32)),
        grid=(B, ns),
        in_specs=[
            pl.BlockSpec((None, ts, Cp), lambda b, s: (b, s, 0)),
            pl.BlockSpec((1, Cp), lambda b, s: (0, 0)),
            pl.BlockSpec((1, Cp), lambda b, s: (0, 0)),
            pl.BlockSpec((Cp, num_groups), lambda b, s: (0, 0)),
            pl.BlockSpec((num_groups, Cp), lambda b, s: (0, 0)),
        ],
        out_specs=(pl.BlockSpec((None, 1, Cp), lambda b, s: (b, 0, 0)),
                   pl.BlockSpec((None, 1, Cp), lambda b, s: (b, 0, 0))),
        scratch_shapes=[pltpu.VMEM((1, Cp), jnp.float32),
                        pltpu.VMEM((1, Cp), jnp.float32)],
        compiler_params=pltpu.CompilerParams(
            dimension_semantics=("parallel", "arbitrary")),
    )(x, gamma, beta, mg, mgt)

    # ---------------- Kernel 2: fused qkv + flash attention + out-proj ---------
    tq = _seq_tile(S)
    tk = _seq_tile(S)
    nq, nkv = S // tq, S // tk
    attn_kernel = functools.partial(_attn_kernel, cmp=Cmp)

    out = pl.pallas_call(
        attn_kernel,
        out_shape=jax.ShapeDtypeStruct((B, S, Cop), jnp.float32),
        grid=(B, nq, nkv),
        in_specs=[
            pl.BlockSpec((None, tq, Cp), lambda b, i, j: (b, i, 0)),   # x (q tile / skip)
            pl.BlockSpec((None, tk, Cp), lambda b, i, j: (b, j, 0)),   # x (kv tile)
            pl.BlockSpec((None, 1, Cp), lambda b, i, j: (b, 0, 0)),    # GN scale
            pl.BlockSpec((None, 1, Cp), lambda b, i, j: (b, 0, 0)),    # GN shift
            pl.BlockSpec((Cp, Cmp), lambda b, i, j: (0, 0)),           # wq (bf16)
            pl.BlockSpec((1, Cmp), lambda b, i, j: (0, 0)),            # bq
            pl.BlockSpec((Cp, 2 * Cmp), lambda b, i, j: (0, 0)),       # wkv (bf16)
            pl.BlockSpec((1, 2 * Cmp), lambda b, i, j: (0, 0)),        # bkv
            pl.BlockSpec((Cmp, Cop), lambda b, i, j: (0, 0)),          # wo (bf16)
            pl.BlockSpec((1, Cop), lambda b, i, j: (0, 0)),            # bo
        ],
        out_specs=pl.BlockSpec((None, tq, Cop), lambda b, i, j: (b, i, 0)),
        scratch_shapes=[
            pltpu.VMEM((tq, Cmp), jnp.bfloat16),   # cached q (scaled)
            pltpu.VMEM((tq, 1), jnp.float32),      # running max
            pltpu.VMEM((tq, 1), jnp.float32),      # running denom
            pltpu.VMEM((tq, Cmp), jnp.float32),    # output accumulator
        ],
        compiler_params=pltpu.CompilerParams(
            dimension_semantics=("parallel", "parallel", "arbitrary"),
            vmem_limit_bytes=48 * 1024 * 1024),
    )(x, x, scale, shift, wq_bf, bq, wkv_bf, bkv, wo_bf, bo)

    out = out[:, :, :Co]
    return jnp.transpose(out.reshape(B, H, W, Co), (0, 3, 1, 2))


# ----------------------------------------------------------------------------
# Pure-JAX reference mirroring the PyTorch forward exactly (f32 throughout)
# ----------------------------------------------------------------------------
def reference(x, params, num_groups=32, eps=1e-6):
    B, C, H, W = x.shape
    xr = x.reshape(B, num_groups, C // num_groups, H, W)
    mean = xr.mean(axis=(2, 3, 4), keepdims=True)
    var = xr.var(axis=(2, 3, 4), keepdims=True)
    hn = ((xr - mean) / jnp.sqrt(var + eps)).reshape(B, C, H, W)
    hn = hn * params["gamma"].reshape(1, C, 1, 1) + params["beta"].reshape(1, C, 1, 1)

    def conv1x1(h, w, b):  # w stored as (C_in, C_out)
        return jnp.einsum("bchw,cd->bdhw", h, w) + b.reshape(1, -1, 1, 1)

    q = conv1x1(hn, params["wq"], params["bq"])
    k = conv1x1(hn, params["wk"], params["bk"])
    v = conv1x1(hn, params["wv"], params["bv"])
    Cm = q.shape[1]
    w_ = jnp.einsum("bchw,bcHW->bhwHW", q, k)
    w_ = jax.nn.softmax(w_.reshape(B, H, W, H * W) / math.sqrt(Cm), axis=-1)
    w_ = w_.reshape(B, H, W, H, W)
    o = jnp.einsum("bhwHW,bcHW->bchw", w_, v)
    o = conv1x1(o, params["wo"], params["bo"])
    return o + x


def init_params(key, in_channels, mid_channels, out_channels):
    # Weights stored as (C_in, C_out) matmul form (transpose of PyTorch's
    # (C_out, C_in, 1, 1) conv weight).  The real module uses init_scale=0.0 for
    # project_out; we use small nonzero values so the kernel path is exercised.
    ks = jax.random.split(key, 8)
    s = 0.1
    return {
        "gamma": jnp.ones((in_channels,), jnp.float32),
        "beta": jnp.zeros((in_channels,), jnp.float32),
        "wq": s * jax.random.normal(ks[0], (in_channels, mid_channels), jnp.float32),
        "bq": s * jax.random.normal(ks[1], (mid_channels,), jnp.float32),
        "wk": s * jax.random.normal(ks[2], (in_channels, mid_channels), jnp.float32),
        "bk": s * jax.random.normal(ks[3], (mid_channels,), jnp.float32),
        "wv": s * jax.random.normal(ks[4], (in_channels, mid_channels), jnp.float32),
        "bv": s * jax.random.normal(ks[5], (mid_channels,), jnp.float32),
        "wo": s * jax.random.normal(ks[6], (mid_channels, out_channels), jnp.float32),
        "bo": s * jax.random.normal(ks[7], (out_channels,), jnp.float32),
    }


if __name__ == "__main__":
    # GroupNorm(num_groups=32) requires channels to be a multiple of 32.
    B, C, H, W = 2, 32, 8, 8
    mid_channels, out_channels = C, C

    key = jax.random.PRNGKey(0)
    kx, kp = jax.random.split(key)
    x = jax.random.normal(kx, (B, C, H, W), jnp.float32)
    params = init_params(kp, C, mid_channels, out_channels)

    out = attention_block(x, params)
    out = jax.block_until_ready(out)

    ref = jax.block_until_ready(reference(x, params))
    assert out.shape == (B, out_channels, H, W)
    # bf16 MXU inputs + approx reciprocal => looser tolerance than pure-f32.
    assert jnp.allclose(out, ref, rtol=5e-2, atol=5e-2), float(jnp.max(jnp.abs(out - ref)))
    print("KERNEL_OK")
</pallas_src>

<mosaic_0001>
module attributes {stable_mosaic.version = 11 : i64} {
  func.func @_gn_stats_kernel(%arg0: i32, %arg1: i32, %arg2: memref<1x64x128xf32, #tpu.memory_space<vmem>>, %arg3: memref<1x128xf32, #tpu.memory_space<vmem>>, %arg4: memref<1x128xf32, #tpu.memory_space<vmem>>, %arg5: memref<128x32xf32, #tpu.memory_space<vmem>>, %arg6: memref<32x128xf32, #tpu.memory_space<vmem>>, %arg7: memref<1x1x128xf32, #tpu.memory_space<vmem>>, %arg8: memref<1x1x128xf32, #tpu.memory_space<vmem>>, %arg9: memref<1x128xf32, #tpu.memory_space<vmem>>, %arg10: memref<1x128xf32, #tpu.memory_space<vmem>>) attributes {dimension_semantics = [#tpu.dimension_semantics<parallel>, #tpu.dimension_semantics<arbitrary>], iteration_bounds = array<i64: 2, 1>, scalar_prefetch = 0 : i64, scratch_operands = 2 : i64, tpu.core_type = #tpu.core_type<tc>, window_params = [{transform_indices = @transform_0, window_bounds = array<i64: 1, 64, 128>}, {pipeline_mode = #tpu.pipeline_mode<synchronous>, transform_indices = @transform_1, window_bounds = array<i64: 1, 128>}, {pipeline_mode = #tpu.pipeline_mode<synchronous>, transform_indices = @transform_2, window_bounds = array<i64: 1, 128>}, {pipeline_mode = #tpu.pipeline_mode<synchronous>, transform_indices = @transform_3, window_bounds = array<i64: 128, 32>}, {pipeline_mode = #tpu.pipeline_mode<synchronous>, transform_indices = @transform_4, window_bounds = array<i64: 32, 128>}, {transform_indices = @transform_5, window_bounds = array<i64: 1, 1, 128>}, {transform_indices = @transform_6, window_bounds = array<i64: 1, 1, 128>}]} {
    %c0_i32 = arith.constant 0 : i32
    %0 = arith.cmpi eq, %arg1, %c0_i32 : i32
    %1 = arith.extui %0 : i1 to i32
    %c0_i32_0 = arith.constant 0 : i32
    %2 = arith.cmpi ne, %1, %c0_i32_0 : i32
    scf.if %2 {
      %cst_14 = arith.constant 0.000000e+00 : f32
      %19 = vector.broadcast %cst_14 : f32 to vector<1x128xf32>
      %c0_15 = arith.constant 0 : index
      %c0_16 = arith.constant 0 : index
      %20 = vector.load %arg9[%c0_15, %c0_16] : memref<1x128xf32, #tpu.memory_space<vmem>>, vector<1x128xf32>
      tpu.vector_store %arg9[%c0_15, %c0_16], %19 {strides = array<i32>} : memref<1x128xf32, #tpu.memory_space<vmem>>, vector<1x128xf32>,
      %cst_17 = arith.constant 0.000000e+00 : f32
      %21 = vector.broadcast %cst_17 : f32 to vector<1x128xf32>
      %c0_18 = arith.constant 0 : index
      %c0_19 = arith.constant 0 : index
      %22 = vector.load %arg10[%c0_18, %c0_19] : memref<1x128xf32, #tpu.memory_space<vmem>>, vector<1x128xf32>
      tpu.vector_store %arg10[%c0_18, %c0_19], %21 {strides = array<i32>} : memref<1x128xf32, #tpu.memory_space<vmem>>, vector<1x128xf32>,
    } else {
    }
    %c0 = arith.constant 0 : index
    %c0_1 = arith.constant 0 : index
    %c0_2 = arith.constant 0 : index
    %3 = vector.load %arg2[%c0, %c0_1, %c0_2] : memref<1x64x128xf32, #tpu.memory_space<vmem>>, vector<1x64x128xf32>
    %4 = vector.shape_cast %3 : vector<1x64x128xf32> to vector<64x128xf32>
    %c0_3 = arith.constant 0 : index
    %c0_4 = arith.constant 0 : index
    %5 = vector.load %arg9[%c0_3, %c0_4] : memref<1x128xf32, #tpu.memory_space<vmem>>, vector<1x128xf32>
    %cst = arith.constant dense<0.000000e+00> : vector<128xf32>
    %6 = vector.multi_reduction <add>, %4, %cst [0] : vector<64x128xf32> to vector<128xf32>
    %7 = vector.shape_cast %6 : vector<128xf32> to vector<1x128xf32>
    %8 = arith.addf %5, %7 : vector<1x128xf32>
    %c0_5 = arith.constant 0 : index
    %c0_6 = arith.constant 0 : index
    %9 = vector.load %arg9[%c0_5, %c0_6] : memref<1x128xf32, #tpu.memory_space<vmem>>, vector<1x128xf32>
    tpu.vector_store %arg9[%c0_5, %c0_6], %8 {strides = array<i32>} : memref<1x128xf32, #tpu.memory_space<vmem>>, vector<1x128xf32>,
    %c0_7 = arith.constant 0 : index
    %c0_8 = arith.constant 0 : index
    %10 = vector.load %arg10[%c0_7, %c0_8] : memref<1x128xf32, #tpu.memory_space<vmem>>, vector<1x128xf32>
    %11 = arith.mulf %4, %4 : vector<64x128xf32>
    %cst_9 = arith.constant dense<0.000000e+00> : vector<128xf32>
    %12 = vector.multi_reduction <add>, %11, %cst_9 [0] : vector<64x128xf32> to vector<128xf32>
    %13 = vector.shape_cast %12 : vector<128xf32> to vector<1x128xf32>
    %14 = arith.addf %10, %13 : vector<1x128xf32>
    %c0_10 = arith.constant 0 : index
    %c0_11 = arith.constant 0 : index
    %15 = vector.load %arg10[%c0_10, %c0_11] : memref<1x128xf32, #tpu.memory_space<vmem>>, vector<1x128xf32>
    tpu.vector_store %arg10[%c0_10, %c0_11], %14 {strides = array<i32>} : memref<1x128xf32, #tpu.memory_space<vmem>>, vector<1x128xf32>,
    %c0_i32_12 = arith.constant 0 : i32
    %16 = arith.cmpi eq, %arg1, %c0_i32_12 : i32
    %17 = arith.extui %16 : i1 to i32
    %c0_i32_13 = arith.constant 0 : i32
    %18 = arith.cmpi ne, %17, %c0_i32_13 : i32
    scf.if %18 {
      %c0_14 = arith.constant 0 : index
      %c0_15 = arith.constant 0 : index
      %19 = vector.load %arg9[%c0_14, %c0_15] : memref<1x128xf32, #tpu.memory_space<vmem>>, vector<1x128xf32>
      %c0_16 = arith.constant 0 : index
      %c0_17 = arith.constant 0 : index
      %20 = vector.load %arg5[%c0_16, %c0_17] : memref<128x32xf32, #tpu.memory_space<vmem>>, vector<128x32xf32>
      %cst_18 = arith.constant dense<0.000000e+00> : vector<1x32xf32>
      %21 = tpu.matmul %19, %20, %cst_18 {dimension_numbers = #tpu.dot_dimension_numbers<[1], [0], [0], [1], [0, 0, 1, 1], [], []>} : vector<1x128xf32>, vector<128x32xf32>, vector<1x32xf32> -> vector<1x32xf32>
      %c0_19 = arith.constant 0 : index
      %c0_20 = arith.constant 0 : index
      %22 = vector.load %arg10[%c0_19, %c0_20] : memref<1x128xf32, #tpu.memory_space<vmem>>, vector<1x128xf32>
      %c0_21 = arith.constant 0 : index
      %c0_22 = arith.constant 0 : index
      %23 = vector.load %arg5[%c0_21, %c0_22] : memref<128x32xf32, #tpu.memory_space<vmem>>, vector<128x32xf32>
      %cst_23 = arith.constant dense<0.000000e+00> : vector<1x32xf32>
      %24 = tpu.matmul %22, %23, %cst_23 {dimension_numbers = #tpu.dot_dimension_numbers<[1], [0], [0], [1], [0, 0, 1, 1], [], []>} : vector<1x128xf32>, vector<128x32xf32>, vector<1x32xf32> -> vector<1x32xf32>
      %cst_24 = arith.constant 1.562500e-02 : f32
      %25 = vector.broadcast %cst_24 : f32 to vector<1x32xf32>
      %26 = arith.mulf %21, %25 : vector<1x32xf32>
      %cst_25 = arith.constant 1.562500e-02 : f32
      %27 = vector.broadcast %cst_25 : f32 to vector<1x32xf32>
      %28 = arith.mulf %24, %27 : vector<1x32xf32>
      %29 = arith.mulf %26, %26 : vector<1x32xf32>
      %30 = arith.subf %28, %29 : vector<1x32xf32>
      %cst_26 = arith.constant 9.99999997E-7 : f32
      %31 = vector.broadcast %cst_26 : f32 to vector<1x32xf32>
      %32 = arith.addf %30, %31 : vector<1x32xf32>
      %33 = math.rsqrt %32 : vector<1x32xf32>
      %c0_27 = arith.constant 0 : index
      %c0_28 = arith.constant 0 : index
      %34 = vector.load %arg6[%c0_27, %c0_28] : memref<32x128xf32, #tpu.memory_space<vmem>>, vector<32x128xf32>
      %cst_29 = arith.constant dense<0.000000e+00> : vector<1x128xf32>
      %35 = tpu.matmul %26, %34, %cst_29 {dimension_numbers = #tpu.dot_dimension_numbers<[1], [0], [0], [1], [0, 0, 1, 1], [], []>} : vector<1x32xf32>, vector<32x128xf32>, vector<1x128xf32> -> vector<1x128xf32>
      %c0_30 = arith.constant 0 : index
      %c0_31 = arith.constant 0 : index
      %36 = vector.load %arg6[%c0_30, %c0_31] : memref<32x128xf32, #tpu.memory_space<vmem>>, vector<32x128xf32>
      %cst_32 = arith.constant dense<0.000000e+00> : vector<1x128xf32>
      %37 = tpu.matmul %33, %36, %cst_32 {dimension_numbers = #tpu.dot_dimension_numbers<[1], [0], [0], [1], [0, 0, 1, 1], [], []>} : vector<1x32xf32>, vector<32x128xf32>, vector<1x128xf32> -> vector<1x128xf32>
      %c0_33 = arith.constant 0 : index
      %c0_34 = arith.constant 0 : index
      %38 = vector.load %arg3[%c0_33, %c0_34] : memref<1x128xf32, #tpu.memory_space<vmem>>, vector<1x128xf32>
      %39 = arith.mulf %37, %38 : vector<1x128xf32>
      %c0_35 = arith.constant 0 : index
      %c0_36 = arith.constant 0 : index
      %c0_37 = arith.constant 0 : index
      %40 = vector.load %arg7[%c0_35, %c0_36, %c0_37] : memref<1x1x128xf32, #tpu.memory_space<vmem>>, vector<1x1x128xf32>
      %41 = vector.shape_cast %40 : vector<1x1x128xf32> to vector<1x128xf32>
      %42 = vector.shape_cast %39 : vector<1x128xf32> to vector<1x1x128xf32>
      tpu.vector_store %arg7[%c0_35, %c0_36, %c0_37], %42 {strides = array<i32>} : memref<1x1x128xf32, #tpu.memory_space<vmem>>, vector<1x1x128xf32>,
      %c0_38 = arith.constant 0 : index
      %c0_39 = arith.constant 0 : index
      %43 = vector.load %arg4[%c0_38, %c0_39] : memref<1x128xf32, #tpu.memory_space<vmem>>, vector<1x128xf32>
      %44 = arith.mulf %35, %39 : vector<1x128xf32>
      %45 = arith.subf %43, %44 : vector<1x128xf32>
      %c0_40 = arith.constant 0 : index
      %c0_41 = arith.constant 0 : index
      %c0_42 = arith.constant 0 : index
      %46 = vector.load %arg8[%c0_40, %c0_41, %c0_42] : memref<1x1x128xf32, #tpu.memory_space<vmem>>, vector<1x1x128xf32>
      %47 = vector.shape_cast %46 : vector<1x1x128xf32> to vector<1x128xf32>
      %48 = vector.shape_cast %45 : vector<1x128xf32> to vector<1x1x128xf32>
      tpu.vector_store %arg8[%c0_40, %c0_41, %c0_42], %48 {strides = array<i32>} : memref<1x1x128xf32, #tpu.memory_space<vmem>>, vector<1x1x128xf32>,
    } else {
    }
    return
  }
  func.func @transform_0(%arg0: i32, %arg1: i32) -> (i32, i32, i32) {
    %c0_i32 = arith.constant 0 : i32
    %c0_i32_0 = arith.constant 0 : i32
    return %arg0, %arg1, %c0_i32 : i32, i32, i32
  }
  func.func @transform_1(%arg0: i32, %arg1: i32) -> (i32, i32) {
    %c0_i32 = arith.constant 0 : i32
    %c0_i32_0 = arith.constant 0 : i32
    %c0_i32_1 = arith.constant 0 : i32
    return %c0_i32, %c0_i32_0 : i32, i32
  }
  func.func @transform_2(%arg0: i32, %arg1: i32) -> (i32, i32) {
    %c0_i32 = arith.constant 0 : i32
    %c0_i32_0 = arith.constant 0 : i32
    %c0_i32_1 = arith.constant 0 : i32
    return %c0_i32, %c0_i32_0 : i32, i32
  }
  func.func @transform_3(%arg0: i32, %arg1: i32) -> (i32, i32) {
    %c0_i32 = arith.constant 0 : i32
    %c0_i32_0 = arith.constant 0 : i32
    %c0_i32_1 = arith.constant 0 : i32
    return %c0_i32, %c0_i32_0 : i32, i32
  }
  func.func @transform_4(%arg0: i32, %arg1: i32) -> (i32, i32) {
    %c0_i32 = arith.constant 0 : i32
    %c0_i32_0 = arith.constant 0 : i32
    %c0_i32_1 = arith.constant 0 : i32
    return %c0_i32, %c0_i32_0 : i32, i32
  }
  func.func @transform_5(%arg0: i32, %arg1: i32) -> (i32, i32, i32) {
    %c0_i32 = arith.constant 0 : i32
    %c0_i32_0 = arith.constant 0 : i32
    %c0_i32_1 = arith.constant 0 : i32
    return %arg0, %c0_i32, %c0_i32_0 : i32, i32, i32
  }
  func.func @transform_6(%arg0: i32, %arg1: i32) -> (i32, i32, i32) {
    %c0_i32 = arith.constant 0 : i32
    %c0_i32_0 = arith.constant 0 : i32
    %c0_i32_1 = arith.constant 0 : i32
    return %arg0, %c0_i32, %c0_i32_0 : i32, i32, i32
  }
}

</mosaic_0001>

<llo_original>
// kernel: tpu_custom_call.1
$region0: #{tpu_custom_call.1}
  #allocation0 [shape = 'u32[]', space=smem, size = 0x4, offset = 0x4, fixed_abs, tag = 'smem constant byte address 0x4 - core index']
  #allocation1 [shape = 'u32[144,128]{1,0:T(1,128)}', space=vmem, size = 0x12000, scoped, tag = 'internal scratch']
  #allocation2 [shape = 'f32[1,128]{1,0:T(1,128)}', space=vmem, size = 0x200, scoped, tag = 'scratch operand']
  #allocation3 [shape = 'f32[1,128]{1,0:T(1,128)}', space=vmem, size = 0x200, scoped, tag = 'scratch operand']
  %s0 = inlined_call_operand.vmem [shape: f32[2,64,128], index: 0, kind: input, shape index: {}]
  %s1 = inlined_call_operand.vmem [shape: f32[1,128], index: 1, kind: input, shape index: {}]
  %s2 = inlined_call_operand.vmem [shape: f32[1,128], index: 2, kind: input, shape index: {}]
  %s3 = inlined_call_operand.vmem [shape: f32[128,32], index: 3, kind: input, shape index: {}]
  %s4 = inlined_call_operand.vmem [shape: f32[32,128], index: 4, kind: input, shape index: {}]
  %s5 = inlined_call_operand.hbm [shape: f32[2,1,128], index: 5, kind: output, shape index: {0}]
  %s6 = inlined_call_operand.hbm [shape: f32[2,1,128], index: 6, kind: output, shape index: {1}]
  %7 = xla_tuple %s5, %s6
  %s8 = sld [smem:[#allocation0]]
  $region69: #{tpu_custom_call.1} parent=0
    _
  %s10 = ssub.s32 1, %s8
  %s11 = scalar_select 0, %s10, %s8
  $region1: #{tpu_custom_call.1} parent=0
    #allocation4 [shape = 'u8[1024]{0}', space=vmem, size = 0x400, scoped, tag = 'output window, operand 0']
    #allocation5 [shape = 's32[2]{0}', space=sflag, size = 0x8, scoped, tag = 'scoped memory for tpu_custom_call.1']
    #allocation6 [shape = 'u8[1024]{0}', space=vmem, size = 0x400, scoped, tag = 'output window, operand 1']
    #allocation7 [shape = 's32[2]{0}', space=sflag, size = 0x8, scoped, tag = 'scoped memory for tpu_custom_call.1']
    %12 = vsyncpa [#allocation5], 0
    %s13 = scalar_lea.sflag [#allocation5], 1
    %14 = vsyncpa %s13, 0
    %15 = vsyncpa [#allocation7], 0
    %s16 = scalar_lea.sflag [#allocation7], 1
    %17 = vsyncpa %s16, 0
    loop: start=0, step=1, limit=4
    $region2: #{tpu_custom_call.1} parent=1 // loop_pre_header
      _
    $region3: #{tpu_custom_call.1} parent=1 // loop_header
      %s19 = sphi 0, %s23
      %p20 = scmp.ge.s32.totalorder %s19, 4
      %s26 = sphi 0, %s38
      %s27 = sphi 0, %s34
      %s28 = sphi 0, %s26
      %s29 = sphi 0, %s27
      %s30 = sphi 0, %s28
      %s31 = sphi 0, %s29
      %s43 = sphi 0, %s45
      %s46 = sphi 0, %s43
      %s47 = sphi 0, %s46
      %s63 = sphi 0, %s47
      %s67 = sphi 0, %s67
      %s69 = sphi 0, %s67
      %s70 = sphi 0, %s69
      %s84 = sphi 0, %s70
      %s88 = sphi 0, %s88
      %s90 = sphi 0, %s88
      %s91 = sphi 0, %s90
      %s105 = sphi 0, %s91
      %s109 = sphi 0, %s109
      %s111 = sphi 0, %s109
      %s112 = sphi 0, %s111
      %s126 = sphi 0, %s112
      %s130 = sphi 0, %s130
      %s132 = sphi 0, %s130
      %s133 = sphi 0, %s132
      %s147 = sphi 0, %s133
      %s153 = sphi 0, %s155
      %s156 = sphi 0, %s153
      %s157 = sphi 0, %s156
      %s173 = sphi 0, %s157
      %s179 = sphi 0, %s181
      %s182 = sphi 0, %s179
      %s183 = sphi 0, %s182
      %s199 = sphi 0, %s183
    $region4: #{tpu_custom_call.1} parent=1 // loop_header_branch
      %22 = sbr.rel (%p20) target = $region8
    $region5: #{tpu_custom_call.1} parent=1 // loop_body
      %s24 = ssub.s32 %s19, 1
      %s25 = ssub.s32 %s19, 2
      %s32 = sadd.s32 1, %s27
      %p33 = scmp.ge.s32.totalorder %s32, 1
      %s34 = scalar_select %p33, 0, %s32
      %s35 = sadd.s32 1, %s26
      %s36 = scalar_select %p33, %s35, %s26
      %p37 = scmp.ge.s32.totalorder %s36, 2
      %s38 = scalar_select %p37, 0, %s36
      %s39 = ssub.s32 %s26, %s38
      %s40 = ssub.s32 %s27, %s34
      %s41 = sor.u32 %s39, %s40
      %p42 = scmp.eq.s32.totalorder %s41, 0
      %s44 = sadd.s32 %s43, 1
      %s45 = scalar_select %p42, %s43, %s44
      %p48 = pneg %p42
      %p49 = scmp.eq.s32.totalorder %s19, 1
      %p50 = por %p48, %p49
      %p51 = scmp.ne.s32.totalorder %s43, %s46
      %p52 = scmp.eq.s32.totalorder %s19, 0
      %p53 = por %p51, %p52
      %p54 = scmp.ne.s32.totalorder %s43, %s46
      %p55 = scmp.eq.s32.totalorder %s24, 1
      %p56 = por %p54, %p55
      %p57 = scmp.ne.s32.totalorder %s46, %s47
      %p58 = scmp.eq.s32.totalorder %s24, 0
      %p59 = por %p57, %p58
      %p60 = scmp.ne.s32.totalorder %s46, %s47
      %p61 = scmp.eq.s32.totalorder %s25, 1
      %p62 = por %p60, %p61
      %p64 = scmp.ne.s32.totalorder %s47, %s63
      %p65 = scmp.eq.s32.totalorder %s25, 0
      %p66 = por %p64, %p65
      %s68 = sadd.s32 %s67, 1
      %p71 = scmp.eq.s32.totalorder %s19, 1
      %p72 = scmp.ne.s32.totalorder %s67, %s69
      %p73 = scmp.eq.s32.totalorder %s19, 0
      %p74 = por %p72, %p73
      %p75 = scmp.ne.s32.totalorder %s67, %s69
      %p76 = scmp.eq.s32.totalorder %s24, 1
      %p77 = por %p75, %p76
      %p78 = scmp.ne.s32.totalorder %s69, %s70
      %p79 = scmp.eq.s32.totalorder %s24, 0
      %p80 = por %p78, %p79
      %p81 = scmp.ne.s32.totalorder %s69, %s70
      %p82 = scmp.eq.s32.totalorder %s25, 1
      %p83 = por %p81, %p82
      %p85 = scmp.ne.s32.totalorder %s70, %s84
      %p86 = scmp.eq.s32.totalorder %s25, 0
      %p87 = por %p85, %p86
      %s89 = sadd.s32 %s88, 1
      %p92 = scmp.eq.s32.totalorder %s19, 1
      %p93 = scmp.ne.s32.totalorder %s88, %s90
      %p94 = scmp.eq.s32.totalorder %s19, 0
      %p95 = por %p93, %p94
      %p96 = scmp.ne.s32.totalorder %s88, %s90
      %p97 = scmp.eq.s32.totalorder %s24, 1
      %p98 = por %p96, %p97
      %p99 = scmp.ne.s32.totalorder %s90, %s91
      %p100 = scmp.eq.s32.totalorder %s24, 0
      %p101 = por %p99, %p100
      %p102 = scmp.ne.s32.totalorder %s90, %s91
      %p103 = scmp.eq.s32.totalorder %s25, 1
      %p104 = por %p102, %p103
      %p106 = scmp.ne.s32.totalorder %s91, %s105
      %p107 = scmp.eq.s32.totalorder %s25, 0
      %p108 = por %p106, %p107
      %s110 = sadd.s32 %s109, 1
      %p113 = scmp.eq.s32.totalorder %s19, 1
      %p114 = scmp.ne.s32.totalorder %s109, %s111
      %p115 = scmp.eq.s32.totalorder %s19, 0
      %p116 = por %p114, %p115
      %p117 = scmp.ne.s32.totalorder %s109, %s111
      %p118 = scmp.eq.s32.totalorder %s24, 1
      %p119 = por %p117, %p118
      %p120 = scmp.ne.s32.totalorder %s111, %s112
      %p121 = scmp.eq.s32.totalorder %s24, 0
      %p122 = por %p120, %p121
      %p123 = scmp.ne.s32.totalorder %s111, %s112
      %p124 = scmp.eq.s32.totalorder %s25, 1
      %p125 = por %p123, %p124
      %p127 = scmp.ne.s32.totalorder %s112, %s126
      %p128 = scmp.eq.s32.totalorder %s25, 0
      %p129 = por %p127, %p128
      %s131 = sadd.s32 %s130, 1
      %p134 = scmp.eq.s32.totalorder %s19, 1
      %p135 = scmp.ne.s32.totalorder %s130, %s132
      %p136 = scmp.eq.s32.totalorder %s19, 0
      %p137 = por %p135, %p136
      %p138 = scmp.ne.s32.totalorder %s130, %s132
      %p139 = scmp.eq.s32.totalorder %s24, 1
      %p140 = por %p138, %p139
      %p141 = scmp.ne.s32.totalorder %s132, %s133
      %p142 = scmp.eq.s32.totalorder %s24, 0
      %p143 = por %p141, %p142
      %p144 = scmp.ne.s32.totalorder %s132, %s133
      %p145 = scmp.eq.s32.totalorder %s25, 1
      %p146 = por %p144, %p145
      %p148 = scmp.ne.s32.totalorder %s133, %s147
      %p149 = scmp.eq.s32.totalorder %s25, 0
      %p150 = por %p148, %p149
      %s151 = ssub.s32 %s26, %s38
      %p152 = scmp.eq.s32.totalorder %s151, 0
      %s154 = sadd.s32 %s153, 1
      %s155 = scalar_select %p152, %s153, %s154
      %p158 = pneg %p152
      %p159 = scmp.eq.s32.totalorder %s19, 1
      %p160 = por %p158, %p159
      %p161 = scmp.ne.s32.totalorder %s153, %s156
      %p162 = scmp.eq.s32.totalorder %s19, 0
      %p163 = por %p161, %p162
      %p164 = scmp.ne.s32.totalorder %s153, %s156
      %p165 = scmp.eq.s32.totalorder %s24, 1
      %p166 = por %p164, %p165
      %p167 = scmp.ne.s32.totalorder %s156, %s157
      %p168 = scmp.eq.s32.totalorder %s24, 0
      %p169 = por %p167, %p168
      %p170 = scmp.ne.s32.totalorder %s156, %s157
      %p171 = scmp.eq.s32.totalorder %s25, 1
      %p172 = por %p170, %p171
      %p174 = scmp.ne.s32.totalorder %s157, %s173
      %p175 = scmp.eq.s32.totalorder %s25, 0
      %p176 = por %p174, %p175
      %s177 = ssub.s32 %s26, %s38
      %p178 = scmp.eq.s32.totalorder %s177, 0
      %s180 = sadd.s32 %s179, 1
      %s181 = scalar_select %p178, %s179, %s180
      %p184 = pneg %p178
      %p185 = scmp.eq.s32.totalorder %s19, 1
      %p186 = por %p184, %p185
      %p187 = scmp.ne.s32.totalorder %s179, %s182
      %p188 = scmp.eq.s32.totalorder %s19, 0
      %p189 = por %p187, %p188
      %p190 = scmp.ne.s32.totalorder %s179, %s182
      %p191 = scmp.eq.s32.totalorder %s24, 1
      %p192 = por %p190, %p191
      %p193 = scmp.ne.s32.totalorder %s182, %s183
      %p194 = scmp.eq.s32.totalorder %s24, 0
      %p195 = por %p193, %p194
      %p196 = scmp.ne.s32.totalorder %s182, %s183
      %p197 = scmp.eq.s32.totalorder %s25, 1
      %p198 = por %p196, %p197
      %p200 = scmp.ne.s32.totalorder %s183, %s199
      %p201 = scmp.eq.s32.totalorder %s25, 0
      %p202 = por %p200, %p201
      %p203 = scmp.le.s32.totalorder 1, %s19
      %p204 = scmp.lt.s32.totalorder %s19, 3
      %p205 = pnand %p203, %p204
      %p206 = pneg %p205
      // Predicated region
      $region9: #{tpu_custom_call.1} parent=5 // pred_check
        _
      $region10: #{tpu_custom_call.1} parent=5 // pred_check_branch
        %208 = sbr.rel (%p205) target = $region12
      $region11: #{tpu_custom_call.1} parent=5 // pred_region
        %s209 = ssub.s32 %s19, 1
        // Predicated region
        $region13: #{tpu_custom_call.1} parent=11 // pred_check
          %p210 = pneg %p80
        $region14: #{tpu_custom_call.1} parent=11 // pred_check_branch
          %212 = sbr.rel (%p210) target = $region16
        $region15: #{tpu_custom_call.1} parent=11 // pred_region
          _
        $region16: #{tpu_custom_call.1} parent=11 // pred_fallthru
          _
        // Predicated region
        $region17: #{tpu_custom_call.1} parent=11 // pred_check
          %p213 = pneg %p101
        $region18: #{tpu_custom_call.1} parent=11 // pred_check_branch
          %215 = sbr.rel (%p213) target = $region20
        $region19: #{tpu_custom_call.1} parent=11 // pred_region
          _
        $region20: #{tpu_custom_call.1} parent=11 // pred_fallthru
          _
        // Predicated region
        $region21: #{tpu_custom_call.1} parent=11 // pred_check
          %p216 = pneg %p122
        $region22: #{tpu_custom_call.1} parent=11 // pred_check_branch
          %218 = sbr.rel (%p216) target = $region24
        $region23: #{tpu_custom_call.1} parent=11 // pred_region
          _
        $region24: #{tpu_custom_call.1} parent=11 // pred_fallthru
          _
        // Predicated region
        $region25: #{tpu_custom_call.1} parent=11 // pred_check
          %p219 = pneg %p143
        $region26: #{tpu_custom_call.1} parent=11 // pred_check_branch
          %221 = sbr.rel (%p219) target = $region28
        $region27: #{tpu_custom_call.1} parent=11 // pred_region
          _
        $region28: #{tpu_custom_call.1} parent=11 // pred_fallthru
          _
      $region12: #{tpu_custom_call.1} parent=5 // pred_fallthru
        _
      %p222 = scmp.lt.s32.totalorder %s19, 2
      // Predicated region
      $region29: #{tpu_custom_call.1} parent=5 // pred_check
        %p223 = pneg %p222
      $region30: #{tpu_custom_call.1} parent=5 // pred_check_branch
        %225 = sbr.rel (%p223) target = $region32
      $region31: #{tpu_custom_call.1} parent=5 // pred_region
        // Predicated region
        $region33: #{tpu_custom_call.1} parent=31 // pred_check
          %p226 = pneg %p53
        $region34: #{tpu_custom_call.1} parent=31 // pred_check_branch
          %228 = sbr.rel (%p226) target = $region36
        $region35: #{tpu_custom_call.1} parent=31 // pred_region
          %s229 = smul.u32 8, %s27
          %p230 = scmp.lt.s32.totalorder %s26, 1
          %s231 = scalar_select %p230, %s26, 1
          %p232 = scmp.lt.s32.totalorder %s229, 7
          %s233 = scalar_select %p232, %s229, 7
          %s234 = smul.addr %s231, 8
          %s235 = sadd.s32 %s233, %s234
          %s236 = smul.addr %s235, 8
          %s237 = scalar_lea.vmem %s0, %s236
          %s238 = smul.u32 8, %s27
        $region36: #{tpu_custom_call.1} parent=31 // pred_fallthru
          _
      $region32: #{tpu_custom_call.1} parent=5 // pred_fallthru
        _
      %p239 = scmp.le.s32.totalorder 1, %s19
      %p240 = scmp.lt.s32.totalorder %s19, 3
      %p241 = pnand %p239, %p240
      %p242 = pneg %p241
      // Predicated region
      $region37: #{tpu_custom_call.1} parent=5 // pred_check
        _
      $region38: #{tpu_custom_call.1} parent=5 // pred_check_branch
        %244 = sbr.rel (%p241) target = $region40
      $region39: #{tpu_custom_call.1} parent=5 // pred_region
        %s245 = ssub.s32 %s19, 1
        %s246 = smul.u32 8, %s29
        %p247 = scmp.lt.s32.totalorder %s28, 1
        %s248 = scalar_select %p247, %s28, 1
        %p249 = scmp.lt.s32.totalorder %s246, 7
        %s250 = scalar_select %p249, %s246, 7
        %s251 = smul.addr %s248, 8
        %s252 = sadd.s32 %s250, %s251
        %s253 = smul.addr %s252, 8
        %s254 = scalar_lea.vmem %s0, %s253
        %p255 = pneg %p59
        %p256 = pneg %p56
        %p257 = pneg %p80
        %p258 = pneg %p77
        %p259 = pneg %p101
        %p260 = pneg %p98
        %p261 = pneg %p122
        %p262 = pneg %p119
        %p263 = pneg %p143
        %p264 = pneg %p140
        %p265 = pneg %p169
        %p266 = pneg %p166
        %s267 = sand.u32 %s156, 1
        %s268 = scalar_lea.sflag [#allocation5], %s267
        %s269 = sand.u32 %s156, 1
        %s270 = scalar_lea.vmem [#allocation4], %s269
        %p271 = pneg %p195
        %p272 = pneg %p192
        %s273 = sand.u32 %s182, 1
        %s274 = scalar_lea.sflag [#allocation7], %s273
        %s275 = sand.u32 %s182, 1
        %s276 = scalar_lea.vmem [#allocation6], %s275
        %s277 = smul.u32 8, %s29
        %p278 = scmp.lt.s32.totalorder %s28, 1
        %s279 = scalar_select %p278, %s28, 1
        %p280 = scmp.lt.s32.totalorder %s277, 7
        %s281 = scalar_select %p280, %s277, 7
        %s282 = smul.addr %s279, 8
        %s283 = sadd.s32 %s281, %s282
        %s284 = smul.addr %s283, 8
        %s285 = scalar_lea.vmem %s0, %s284
        %s286 = smul.u32 8, %s29
        %p287 = scmp.eq.s32.totalorder %s29, 0
        // Predicated region
        $region41: #{tpu_custom_call.1} parent=39 // pred_check
          %p288 = pneg %p287
        $region42: #{tpu_custom_call.1} parent=39 // pred_check_branch
          %290 = sbr.rel (%p288) target = $region44
        $region43: #{tpu_custom_call.1} parent=39 // pred_region
          %291 = vst [vmem:[#allocation2] sm:$0x1] 0.0
          %292 = vst [vmem:[#allocation3] sm:$0x1] 0.0
        $region44: #{tpu_custom_call.1} parent=39 // pred_fallthru
          _
        %v293 = vld [vmem:[%s285] sm:$0xff]
        %v294 = vld [vmem:[%s285 + $0x8] sm:$0xff]
        %v295 = vld [vmem:[%s285 + $0x10] sm:$0xff]
        %v296 = vld [vmem:[%s285 + $0x18] sm:$0xff]
        %v297 = vld [vmem:[%s285 + $0x20] sm:$0xff]
        %v298 = vld [vmem:[%s285 + $0x28] sm:$0xff]
        %v299 = vld [vmem:[%s285 + $0x30] sm:$0xff]
        %v300 = vld [vmem:[%s285 + $0x38] sm:$0xff]
        %v301 = vld [vmem:[#allocation2] sm:$0x1]
        %v302 = vadd.f32 %v293, %v294
        %v303 = vadd.f32 %v302, %v295
        %v304 = vadd.f32 %v303, %v296
        %v305 = vadd.f32 %v304, %v297
        %v306 = vadd.f32 %v305, %v298
        %v307 = vadd.f32 %v306, %v299
        %v308 = vadd.f32 %v307, %v300
        %v309 = vrot.slane %v308, 4
        %v310 = vadd.f32 %v308, %v309
        %v311 = vrot.slane %v310, 2
        %v312 = vadd.f32 %v310, %v311
        %v313 = vrot.slane %v312, 1
        %v314 = vadd.f32 %v312, %v313
        %v315 = vadd.f32 %v301, %v314
        %316 = vst [vmem:[#allocation2] sm:$0x1] %v315
        %v317 = vld [vmem:[#allocation3] sm:$0x1]
        %v318 = vmul.f32 %v293, %v293
        %v319 = vmul.f32 %v294, %v294
        %v320 = vmul.f32 %v295, %v295
        %v321 = vmul.f32 %v296, %v296
        %v322 = vmul.f32 %v297, %v297
        %v323 = vmul.f32 %v298, %v298
        %v324 = vmul.f32 %v299, %v299
        %v325 = vmul.f32 %v300, %v300
        %v326 = vadd.f32 %v318, %v319
        %v327 = vadd.f32 %v326, %v320
        %v328 = vadd.f32 %v327, %v321
        %v329 = vadd.f32 %v328, %v322
        %v330 = vadd.f32 %v329, %v323
        %v331 = vadd.f32 %v330, %v324
        %v332 = vadd.f32 %v331, %v325
        %v333 = vrot.slane %v332, 4
        %v334 = vadd.f32 %v332, %v333
        %v335 = vrot.slane %v334, 2
        %v336 = vadd.f32 %v334, %v335
        %v337 = vrot.slane %v336, 1
        %v338 = vadd.f32 %v336, %v337
        %v339 = vadd.f32 %v317, %v338
        %340 = vst [vmem:[#allocation3] sm:$0x1] %v339
        // Predicated region
        $region45: #{tpu_custom_call.1} parent=39 // pred_check
          %p341 = pneg %p287
        $region46: #{tpu_custom_call.1} parent=39 // pred_check_branch
          %343 = sbr.rel (%p341) target = $region48
        $region47: #{tpu_custom_call.1} parent=39 // pred_region
          %v344 = vld [vmem:[#allocation2] sm:$0x1]
          %v345 = vld [vmem:[%s3] sm:$0xff]
          %v346 = vld [vmem:[%s3 + $0x8] sm:$0xff]
          %v347 = vld [vmem:[%s3 + $0x10] sm:$0xff]
          %v348 = vld [vmem:[%s3 + $0x18] sm:$0xff]
          %v349 = vld [vmem:[%s3 + $0x20] sm:$0xff]
          %v350 = vld [vmem:[%s3 + $0x28] sm:$0xff]
          %v351 = vld [vmem:[%s3 + $0x30] sm:$0xff]
          %v352 = vld [vmem:[%s3 + $0x38] sm:$0xff]
          %v353 = vld [vmem:[%s3 + $0x40] sm:$0xff]
          %v354 = vld [vmem:[%s3 + $0x48] sm:$0xff]
          %v355 = vld [vmem:[%s3 + $0x50] sm:$0xff]
          %v356 = vld [vmem:[%s3 + $0x58] sm:$0xff]
          %v357 = vld [vmem:[%s3 + $0x60] sm:$0xff]
          %v358 = vld [vmem:[%s3 + $0x68] sm:$0xff]
          %v359 = vld [vmem:[%s3 + $0x70] sm:$0xff]
          %v360 = vld [vmem:[%s3 + $0x78] sm:$0xff]
          %361 = vmatprep.subr.mxu0 0.0
          %362 = vmatpush1.msra.mxu0 %v360
          %363 = vmatprep.subr.mxu0 0.0
          %364 = vmatpush1.msra.mxu0 %v359
          %365 = vmatprep.subr.mxu0 0.0
          %366 = vmatpush1.msra.mxu0 %v358
          %367 = vmatprep.subr.mxu0 0.0
          %368 = vmatpush1.msra.mxu0 %v357
          %369 = vmatprep.subr.mxu0 0.0
          %370 = vmatpush1.msra.mxu0 %v356
          %371 = vmatprep.subr.mxu0 0.0
          %372 = vmatpush1.msra.mxu0 %v355
          %373 = vmatprep.subr.mxu0 0.0
          %374 = vmatpush1.msra.mxu0 %v354
          %375 = vmatprep.subr.mxu0 0.0
          %376 = vmatpush1.msra.mxu0 %v353
          %377 = vmatprep.subr.mxu0 0.0
          %378 = vmatpush1.msra.mxu0 %v352
          %379 = vmatprep.subr.mxu0 0.0
          %380 = vmatpush1.msra.mxu0 %v351
          %381 = vmatprep.subr.mxu0 0.0
          %382 = vmatpush1.msra.mxu0 %v350
          %383 = vmatprep.subr.mxu0 0.0
          %384 = vmatpush1.msra.mxu0 %v349
          %385 = vmatprep.subr.mxu0 0.0
          %386 = vmatpush1.msra.mxu0 %v348
          %387 = vmatprep.subr.mxu0 0.0
          %388 = vmatpush1.msra.mxu0 %v347
          %389 = vmatprep.subr.mxu0 0.0
          %390 = vmatpush1.msra.mxu0 %v346
          %391 = vmatprep.subr.mxu0 0.0
          %392 = vmatpush1.msra.mxu0 %v345
          %393 = vmatprep.subr.mxu0 0.0
          %394 = vmatpush2.msra.mxu0 0.0
          %395 = vmatprep.subr.mxu0 0.0
          %396 = vmatpush2.msra.mxu0 0.0
          %397 = vmatprep.subr.mxu0 0.0
          %398 = vmatpush2.msra.mxu0 0.0
          %399 = vmatprep.subr.mxu0 0.0
          %400 = vmatpush2.msra.mxu0 0.0
          %401 = vmatprep.subr.mxu0 0.0
          %402 = vmatpush2.msra.mxu0 0.0
          %403 = vmatprep.subr.mxu0 0.0
          %404 = vmatpush2.msra.mxu0 0.0
          %405 = vmatprep.subr.mxu0 0.0
          %406 = vmatpush2.msra.mxu0 0.0
          %407 = vmatprep.subr.mxu0 0.0
          %408 = vmatpush2.msra.mxu0 0.0
          %409 = vmatprep.subr.mxu0 0.0
          %410 = vmatpush2.msra.mxu0 0.0
          %411 = vmatprep.subr.mxu0 0.0
          %412 = vmatpush2.msra.mxu0 0.0
          %413 = vmatprep.subr.mxu0 0.0
          %414 = vmatpush2.msra.mxu0 0.0
          %415 = vmatprep.subr.mxu0 0.0
          %416 = vmatpush2.msra.mxu0 0.0
          %417 = vmatprep.subr.mxu0 0.0
          %418 = vmatpush2.msra.mxu0 0.0
          %419 = vmatprep.subr.mxu0 0.0
          %420 = vmatpush2.msra.mxu0 0.0
          %421 = vmatprep.subr.mxu0 0.0
          %422 = vmatpush2.msra.mxu0 0.0
          %423 = vmatprep.subr.mxu0 0.0
          %424 = vmatpush2.msra.mxu0 0.0
          %425 = vmatprep.mubr.f32.mxu0 0.0
          %426 = vmatmul.mubr.f32.gmra.mxu0 %v344
          %v427 = vpop.f32.mrf.mxu0
          %v428 = vadd.f32 0.0, %v427
          %v429 = vpop.f32.mrf.mxu0
          %430 = vdwg.mxu0
          %v431 = vld [vmem:[#allocation3] sm:$0x1]
          %432 = vmatprep.subr.mxu0 0.0
          %433 = vmatpush1.msra.mxu0 %v360
          %434 = vmatprep.subr.mxu0 0.0
          %435 = vmatpush1.msra.mxu0 %v359
          %436 = vmatprep.subr.mxu0 0.0
          %437 = vmatpush1.msra.mxu0 %v358
          %438 = vmatprep.subr.mxu0 0.0
          %439 = vmatpush1.msra.mxu0 %v357
          %440 = vmatprep.subr.mxu0 0.0
          %441 = vmatpush1.msra.mxu0 %v356
          %442 = vmatprep.subr.mxu0 0.0
          %443 = vmatpush1.msra.mxu0 %v355
          %444 = vmatprep.subr.mxu0 0.0
          %445 = vmatpush1.msra.mxu0 %v354
          %446 = vmatprep.subr.mxu0 0.0
          %447 = vmatpush1.msra.mxu0 %v353
          %448 = vmatprep.subr.mxu0 0.0
          %449 = vmatpush1.msra.mxu0 %v352
          %450 = vmatprep.subr.mxu0 0.0
          %451 = vmatpush1.msra.mxu0 %v351
          %452 = vmatprep.subr.mxu0 0.0
          %453 = vmatpush1.msra.mxu0 %v350
          %454 = vmatprep.subr.mxu0 0.0
          %455 = vmatpush1.msra.mxu0 %v349
          %456 = vmatprep.subr.mxu0 0.0
          %457 = vmatpush1.msra.mxu0 %v348
          %458 = vmatprep.subr.mxu0 0.0
          %459 = vmatpush1.msra.mxu0 %v347
          %460 = vmatprep.subr.mxu0 0.0
          %461 = vmatpush1.msra.mxu0 %v346
          %462 = vmatprep.subr.mxu0 0.0
          %463 = vmatpush1.msra.mxu0 %v345
          %464 = vmatprep.subr.mxu0 0.0
          %465 = vmatpush2.msra.mxu0 0.0
          %466 = vmatprep.subr.mxu0 0.0
          %467 = vmatpush2.msra.mxu0 0.0
          %468 = vmatprep.subr.mxu0 0.0
          %469 = vmatpush2.msra.mxu0 0.0
          %470 = vmatprep.subr.mxu0 0.0
          %471 = vmatpush2.msra.mxu0 0.0
          %472 = vmatprep.subr.mxu0 0.0
          %473 = vmatpush2.msra.mxu0 0.0
          %474 = vmatprep.subr.mxu0 0.0
          %475 = vmatpush2.msra.mxu0 0.0
          %476 = vmatprep.subr.mxu0 0.0
          %477 = vmatpush2.msra.mxu0 0.0
          %478 = vmatprep.subr.mxu0 0.0
          %479 = vmatpush2.msra.mxu0 0.0
          %480 = vmatprep.subr.mxu0 0.0
          %481 = vmatpush2.msra.mxu0 0.0
          %482 = vmatprep.subr.mxu0 0.0
          %483 = vmatpush2.msra.mxu0 0.0
          %484 = vmatprep.subr.mxu0 0.0
          %485 = vmatpush2.msra.mxu0 0.0
          %486 = vmatprep.subr.mxu0 0.0
          %487 = vmatpush2.msra.mxu0 0.0
          %488 = vmatprep.subr.mxu0 0.0
          %489 = vmatpush2.msra.mxu0 0.0
          %490 = vmatprep.subr.mxu0 0.0
          %491 = vmatpush2.msra.mxu0 0.0
          %492 = vmatprep.subr.mxu0 0.0
          %493 = vmatpush2.msra.mxu0 0.0
          %494 = vmatprep.subr.mxu0 0.0
          %495 = vmatpush2.msra.mxu0 0.0
          %496 = vmatprep.mubr.f32.mxu0 0.0
          %497 = vmatmul.mubr.f32.gmra.mxu0 %v431
          %v498 = vpop.f32.mrf.mxu0
          %v499 = vadd.f32 0.0, %v498
          %v500 = vpop.f32.mrf.mxu0
          %501 = vdwg.mxu0
          %v502 = vmul.f32 %v428, 0.015625
          %v503 = vmul.f32 %v499, 0.015625
          %v504 = vmul.f32 %v502, %v502
          %v505 = vsub.f32 %v503, %v504
          %v506 = vadd.f32 %v505, 1e-06
          %v507 = vrsqrt.pop %v506
          %v508 = vld [vmem:[%s4] sm:$0xff]
          %v509 = vld [vmem:[%s4 + $0x8] sm:$0xff]
          %v510 = vld [vmem:[%s4 + $0x10] sm:$0xff]
          %v511 = vld [vmem:[%s4 + $0x18] sm:$0xff]
          %vm512 = vcmask 261120
          %v514 = vsel %vm512, %v502, 0
          %516 = vmatprep.subr.mxu0 0.0
          %517 = vmatpush1.msra.mxu0 0.0
          %518 = vmatprep.subr.mxu0 0.0
          %519 = vmatpush1.msra.mxu0 0.0
          %520 = vmatprep.subr.mxu0 0.0
          %521 = vmatpush1.msra.mxu0 0.0
          %522 = vmatprep.subr.mxu0 0.0
          %523 = vmatpush1.msra.mxu0 0.0
          %524 = vmatprep.subr.mxu0 0.0
          %525 = vmatpush1.msra.mxu0 0.0
          %526 = vmatprep.subr.mxu0 0.0
          %527 = vmatpush1.msra.mxu0 0.0
          %528 = vmatprep.subr.mxu0 0.0
          %529 = vmatpush1.msra.mxu0 0.0
          %530 = vmatprep.subr.mxu0 0.0
          %531 = vmatpush1.msra.mxu0 0.0
          %532 = vmatprep.subr.mxu0 0.0
          %533 = vmatpush1.msra.mxu0 0.0
          %534 = vmatprep.subr.mxu0 0.0
          %535 = vmatpush1.msra.mxu0 0.0
          %536 = vmatprep.subr.mxu0 0.0
          %537 = vmatpush1.msra.mxu0 0.0
          %538 = vmatprep.subr.mxu0 0.0
          %539 = vmatpush1.msra.mxu0 0.0
          %540 = vmatprep.subr.mxu0 0.0
          %541 = vmatpush1.msra.mxu0 %v511
          %542 = vmatprep.subr.mxu0 0.0
          %543 = vmatpush1.msra.mxu0 %v510
          %544 = vmatprep.subr.mxu0 0.0
          %545 = vmatpush1.msra.mxu0 %v509
          %546 = vmatprep.subr.mxu0 0.0
          %547 = vmatpush1.msra.mxu0 %v508
          %548 = vmatprep.subr.mxu0 0.0
          %549 = vmatpush2.msra.mxu0 0.0
          %550 = vmatprep.subr.mxu0 0.0
          %551 = vmatpush2.msra.mxu0 0.0
          %552 = vmatprep.subr.mxu0 0.0
          %553 = vmatpush2.msra.mxu0 0.0
          %554 = vmatprep.subr.mxu0 0.0
          %555 = vmatpush2.msra.mxu0 0.0
          %556 = vmatprep.subr.mxu0 0.0
          %557 = vmatpush2.msra.mxu0 0.0
          %558 = vmatprep.subr.mxu0 0.0
          %559 = vmatpush2.msra.mxu0 0.0
          %560 = vmatprep.subr.mxu0 0.0
          %561 = vmatpush2.msra.mxu0 0.0
          %562 = vmatprep.subr.mxu0 0.0
          %563 = vmatpush2.msra.mxu0 0.0
          %564 = vmatprep.subr.mxu0 0.0
          %565 = vmatpush2.msra.mxu0 0.0
          %566 = vmatprep.subr.mxu0 0.0
          %567 = vmatpush2.msra.mxu0 0.0
          %568 = vmatprep.subr.mxu0 0.0
          %569 = vmatpush2.msra.mxu0 0.0
          %570 = vmatprep.subr.mxu0 0.0
          %571 = vmatpush2.msra.mxu0 0.0
          %572 = vmatprep.subr.mxu0 0.0
          %573 = vmatpush2.msra.mxu0 0.0
          %574 = vmatprep.subr.mxu0 0.0
          %575 = vmatpush2.msra.mxu0 0.0
          %576 = vmatprep.subr.mxu0 0.0
          %577 = vmatpush2.msra.mxu0 0.0
          %578 = vmatprep.subr.mxu0 0.0
          %579 = vmatpush2.msra.mxu0 0.0
          %580 = vmatprep.mubr.f32.mxu0 0.0
          %581 = vmatmul.mubr.f32.gmra.mxu0 %v514
          %v582 = vpop.f32.mrf.mxu0
          %v583 = vadd.f32 0.0, %v582
          %v584 = vpop.f32.mrf.mxu0
          %585 = vdwg.mxu0
          %v587 = vsel %vm512, %v507, 0
          %589 = vmatprep.subr.mxu0 0.0
          %590 = vmatpush1.msra.mxu0 0.0
          %591 = vmatprep.subr.mxu0 0.0
          %592 = vmatpush1.msra.mxu0 0.0
          %593 = vmatprep.subr.mxu0 0.0
          %594 = vmatpush1.msra.mxu0 0.0
          %595 = vmatprep.subr.mxu0 0.0
          %596 = vmatpush1.msra.mxu0 0.0
          %597 = vmatprep.subr.mxu0 0.0
          %598 = vmatpush1.msra.mxu0 0.0
          %599 = vmatprep.subr.mxu0 0.0
          %600 = vmatpush1.msra.mxu0 0.0
          %601 = vmatprep.subr.mxu0 0.0
          %602 = vmatpush1.msra.mxu0 0.0
          %603 = vmatprep.subr.mxu0 0.0
          %604 = vmatpush1.msra.mxu0 0.0
          %605 = vmatprep.subr.mxu0 0.0
          %606 = vmatpush1.msra.mxu0 0.0
          %607 = vmatprep.subr.mxu0 0.0
          %608 = vmatpush1.msra.mxu0 0.0
          %609 = vmatprep.subr.mxu0 0.0
          %610 = vmatpush1.msra.mxu0 0.0
          %611 = vmatprep.subr.mxu0 0.0
          %612 = vmatpush1.msra.mxu0 0.0
          %613 = vmatprep.subr.mxu0 0.0
          %614 = vmatpush1.msra.mxu0 %v511
          %615 = vmatprep.subr.mxu0 0.0
          %616 = vmatpush1.msra.mxu0 %v510
          %617 = vmatprep.subr.mxu0 0.0
          %618 = vmatpush1.msra.mxu0 %v509
          %619 = vmatprep.subr.mxu0 0.0
          %620 = vmatpush1.msra.mxu0 %v508
          %621 = vmatprep.subr.mxu0 0.0
          %622 = vmatpush2.msra.mxu0 0.0
          %623 = vmatprep.subr.mxu0 0.0
          %624 = vmatpush2.msra.mxu0 0.0
          %625 = vmatprep.subr.mxu0 0.0
          %626 = vmatpush2.msra.mxu0 0.0
          %627 = vmatprep.subr.mxu0 0.0
          %628 = vmatpush2.msra.mxu0 0.0
          %629 = vmatprep.subr.mxu0 0.0
          %630 = vmatpush2.msra.mxu0 0.0
          %631 = vmatprep.subr.mxu0 0.0
          %632 = vmatpush2.msra.mxu0 0.0
          %633 = vmatprep.subr.mxu0 0.0
          %634 = vmatpush2.msra.mxu0 0.0
          %635 = vmatprep.subr.mxu0 0.0
          %636 = vmatpush2.msra.mxu0 0.0
          %637 = vmatprep.subr.mxu0 0.0
          %638 = vmatpush2.msra.mxu0 0.0
          %639 = vmatprep.subr.mxu0 0.0
          %640 = vmatpush2.msra.mxu0 0.0
          %641 = vmatprep.subr.mxu0 0.0
          %642 = vmatpush2.msra.mxu0 0.0
          %643 = vmatprep.subr.mxu0 0.0
          %644 = vmatpush2.msra.mxu0 0.0
          %645 = vmatprep.subr.mxu0 0.0
          %646 = vmatpush2.msra.mxu0 0.0
          %647 = vmatprep.subr.mxu0 0.0
          %648 = vmatpush2.msra.mxu0 0.0
          %649 = vmatprep.subr.mxu0 0.0
          %650 = vmatpush2.msra.mxu0 0.0
          %651 = vmatprep.subr.mxu0 0.0
          %652 = vmatpush2.msra.mxu0 0.0
          %653 = vmatprep.mubr.f32.mxu0 0.0
          %654 = vmatmul.mubr.f32.gmra.mxu0 %v587
          %v655 = vpop.f32.mrf.mxu0
          %v656 = vadd.f32 0.0, %v655
          %v657 = vpop.f32.mrf.mxu0
          %658 = vdwg.mxu0
          %v659 = vld [vmem:[%s1] sm:$0x1]
          %v660 = vmul.f32 %v656, %v659
          %661 = vst [vmem:[%s270] sm:$0x1] %v660
          %v662 = vld [vmem:[%s2] sm:$0x1]
          %v663 = vmul.f32 %v583, %v660
          %v664 = vsub.f32 %v662, %v663
          %665 = vst [vmem:[%s276] sm:$0x1] %v664
        $region48: #{tpu_custom_call.1} parent=39 // pred_fallthru
          _
        %s666 = sand.u32 %s156, 1
        %s667 = scalar_lea.sflag [#allocation5], %s666
        %s668 = sand.u32 %s156, 1
        %s669 = scalar_lea.vmem [#allocation4], %s668
        %s670 = sand.u32 %s182, 1
        %s671 = scalar_lea.sflag [#allocation7], %s670
        %s672 = sand.u32 %s182, 1
        %s673 = scalar_lea.vmem [#allocation6], %s672
        // Predicated region
        $region49: #{tpu_custom_call.1} parent=39 // pred_check
          %p674 = pneg %p166
        $region50: #{tpu_custom_call.1} parent=39 // pred_check_branch
          %676 = sbr.rel (%p674) target = $region52
        $region51: #{tpu_custom_call.1} parent=39 // pred_region
          %s678 = ssub.s32 16, 16
          %679 = vsyncadd %s667, %s678
          %s680 = smul.addr %s28, 16
          %s681 = scalar_lea.hbm %s5, %s680
          %s683 = sshll.u32 %s669, 4
          %s684 = int_to_ptr.vmem [resolvable:$true] %s683
          %686 = dma.vmem_to_hbm [thread:$0]  %s684, 16, %s681, %s667
        $region52: #{tpu_custom_call.1} parent=39 // pred_fallthru
          _
        // Predicated region
        $region53: #{tpu_custom_call.1} parent=39 // pred_check
          %p687 = pneg %p192
        $region54: #{tpu_custom_call.1} parent=39 // pred_check_branch
          %689 = sbr.rel (%p687) target = $region56
        $region55: #{tpu_custom_call.1} parent=39 // pred_region
          %s691 = ssub.s32 16, 16
          %692 = vsyncadd %s671, %s691
          %s693 = smul.addr %s28, 16
          %s694 = scalar_lea.hbm %s6, %s693
          %s696 = sshll.u32 %s673, 4
          %s697 = int_to_ptr.vmem [resolvable:$true] %s696
          %699 = dma.vmem_to_hbm [thread:$0]  %s697, 16, %s694, %s671
        $region56: #{tpu_custom_call.1} parent=39 // pred_fallthru
          _
      $region40: #{tpu_custom_call.1} parent=5 // pred_fallthru
        _
      %p700 = scmp.le.s32.totalorder 2, %s19
      // Predicated region
      $region57: #{tpu_custom_call.1} parent=5 // pred_check
        %p701 = pneg %p700
      $region58: #{tpu_custom_call.1} parent=5 // pred_check_branch
        %703 = sbr.rel (%p701) target = $region60
      $region59: #{tpu_custom_call.1} parent=5 // pred_region
        %s704 = ssub.s32 %s19, 2
        // Predicated region
        $region61: #{tpu_custom_call.1} parent=59 // pred_check
          %p705 = pneg %p172
        $region62: #{tpu_custom_call.1} parent=59 // pred_check_branch
          %707 = sbr.rel (%p705) target = $region64
        $region63: #{tpu_custom_call.1} parent=59 // pred_region
          %s708 = sand.u32 %s157, 1
          %s709 = scalar_lea.sflag [#allocation5], %s708
          %s710 = sand.u32 %s157, 1
          %s711 = scalar_lea.vmem [#allocation4], %s710
          %712 = dma.done %s709, 16
        $region64: #{tpu_custom_call.1} parent=59 // pred_fallthru
          _
        // Predicated region
        $region65: #{tpu_custom_call.1} parent=59 // pred_check
          %p713 = pneg %p198
        $region66: #{tpu_custom_call.1} parent=59 // pred_check_branch
          %715 = sbr.rel (%p713) target = $region68
        $region67: #{tpu_custom_call.1} parent=59 // pred_region
          %s716 = sand.u32 %s183, 1
          %s717 = scalar_lea.sflag [#allocation7], %s716
          %s718 = sand.u32 %s183, 1
          %s719 = scalar_lea.vmem [#allocation6], %s718
          %720 = dma.done %s717, 16
        $region68: #{tpu_custom_call.1} parent=59 // pred_fallthru
          _
      $region60: #{tpu_custom_call.1} parent=5 // pred_fallthru
        _
    $region6: #{tpu_custom_call.1} parent=1 // loop_footer
      %s23 = sadd.s32 1, %s19
    $region7: #{tpu_custom_call.1} parent=1 // loop_footer_branch
      %18 = sbr.rel target = $region3
    $region8: #{tpu_custom_call.1} parent=1 // loop_exit
      _
    %721 = vsyncpa [#allocation5], 1
    %s722 = scalar_lea.sflag [#allocation5], 1
    %723 = vsyncpa %s722, 1
    %724 = vsyncpa [#allocation7], 1
    %s725 = scalar_lea.sflag [#allocation7], 1
    %726 = vsyncpa %s725, 1

</llo_original>
